<compile_context>
chip_gen: v7x
topology: tpu7x:2x2x1
jax: 0.10.0
libtpu: 0.0.40
codegen_flags: <defaults>
</compile_context>

<pallas_src>
import functools
import math

import jax
import jax.numpy as jnp
from jax.experimental import pallas as pl
from jax.experimental.pallas import tpu as pltpu


# --------------------------------------------------------------------------- #
# Helpers
# --------------------------------------------------------------------------- #
def _gelu_tanh(x):
    # GELU, tanh approximation (matches torch.nn.GELU(approximate='tanh')).
    c = math.sqrt(2.0 / math.pi)
    return 0.5 * x * (1.0 + jnp.tanh(c * (x + 0.044715 * x * x * x)))


def _round_up(n, m):
    return ((n + m - 1) // m) * m


def _vmem_capacity_bytes():
    """Physical VMEM per TensorCore (64 MiB on v7x, 128 MiB on v5e/v6e)."""
    try:
        return int(pltpu.get_tpu_info().vmem_capacity_bytes)
    except Exception:
        pass
    try:
        kind = jax.devices()[0].device_kind.lower()
        if "v7" in kind:
            return 64 * 1024 * 1024
    except Exception:
        pass
    return 128 * 1024 * 1024


def _default_gelu_dtype(compute_dtype):
    """bf16 GELU on v6e/v7x (bf16 VPU/EUP); f32 on v5e and older / unknown."""
    try:
        kind = jax.devices()[0].device_kind.lower()
    except Exception:
        return jnp.float32
    for old in ("v2", "v3", "v4", "v5"):
        if old in kind:
            return jnp.float32
    return compute_dtype


def _largest_divisor_tile(H, cap):
    """Largest multiple of 128 that divides H (H % 128 == 0) and is <= cap."""
    cap = max(128, (cap // 128) * 128)
    th = min(cap, H)
    while H % th != 0:
        th -= 128
    return th


def _chip_tiling(C):
    """(target_tile_m, weight_budget_bytes, vmem_limit_bytes) per generation.

    Arithmetic intensity w.r.t. weight streaming is ~tile_m FLOPs/byte, so
    tile_m must exceed the MXU/HBM break-even (~680 on v6e, ~311 on v7x).
    The weight budget bounds 2 matrices x 2 pipeline buffers x bf16 tiles.
    """
    vmem_cap = _vmem_capacity_bytes()
    if vmem_cap <= 80 * 1024 * 1024:
        # v7x-class: 64 MiB per TensorCore.
        return 512, 24 * 1024 * 1024, 40 * 1024 * 1024
    # v5e / v6e: 128 MiB.
    return 768, 48 * 1024 * 1024, 96 * 1024 * 1024


# --------------------------------------------------------------------------- #
# Kernel
# --------------------------------------------------------------------------- #
def mlp_kernel(x_ref, wfc_ref, bfc_ref, wproj_ref, bproj_ref, o_ref, acc_ref,
               *, gelu_dtype):
    # x_ref:     (TM, C)   bf16 row tile of flattened tokens (resident per m)
    # wfc_ref:   (C, TH)   bf16 c_fc weight tile  (pre-transposed in wrapper)
    # bfc_ref:   (1, TH)   f32 c_fc bias slice
    # wproj_ref: (TH, C)   bf16 c_proj weight tile (pre-transposed in wrapper)
    # bproj_ref: (1, C)    f32 c_proj bias
    # o_ref:     (TM, C)   output row tile (written on the last h step)
    # acc_ref:   (TM, C)   f32 accumulator scratch
    hi = pl.program_id(1)

    @pl.when(hi == 0)
    def _init():
        # Fold the c_proj bias into the accumulator initialization.
        acc_ref[...] = jnp.broadcast_to(
            bproj_ref[...].astype(jnp.float32), acc_ref.shape)

    # c_fc partial: (TM, C) @ (C, TH) -> (TM, TH), f32 accumulation on MXU.
    h = jnp.dot(x_ref[...], wfc_ref[...], preferred_element_type=jnp.float32)
    h = h + bfc_ref[...].astype(jnp.float32)

    # GELU (tanh approx): bf16 on v6e/v7x, f32 on v5e (no bf16 VPU/EUP).
    h = _gelu_tanh(h.astype(gelu_dtype))

    # Second MXU pass in the compute dtype.
    h = h.astype(wproj_ref.dtype)

    # c_proj partial: (TM, TH) @ (TH, C) -> (TM, C), accumulate in f32.
    acc_ref[...] += jnp.dot(h, wproj_ref[...],
                            preferred_element_type=jnp.float32)

    @pl.when(hi == pl.num_programs(1) - 1)
    def _store():
        o_ref[...] = acc_ref[...].astype(o_ref.dtype)


# --------------------------------------------------------------------------- #
# Wrapper
# --------------------------------------------------------------------------- #
def mlp_forward(x, w_fc, b_fc, w_proj, b_proj, *,
                tile_m=None, compute_dtype=jnp.bfloat16, out_dtype=None):
    """x: (B, T, C). Weights in PyTorch convention: w_fc (H, C), w_proj (C, H).

    out_dtype defaults to x.dtype; pass jnp.bfloat16 to halve output writeback.
    """
    B, T, C = x.shape
    H = w_fc.shape[0]
    assert w_fc.shape == (H, C) and w_proj.shape == (C, H)
    assert b_fc.shape == (H,) and b_proj.shape == (C,)
    M = B * T
    out_dtype = x.dtype if out_dtype is None else out_dtype
    gelu_dtype = _default_gelu_dtype(compute_dtype)

    # ---- One-time operand prep (no per-tile work inside the kernel). ------ #
    # Cast MXU operands to bf16 once; biases stay f32 (added to f32 acc).
    # Transpose weights once so both in-kernel matmuls are plain (M,K)x(K,N).
    x2d = x.reshape(M, C).astype(compute_dtype)
    w_fc_t = jnp.transpose(w_fc).astype(compute_dtype)      # (C, H)
    w_proj_t = jnp.transpose(w_proj).astype(compute_dtype)  # (H, C)
    b_fc2 = b_fc.reshape(1, H).astype(jnp.float32)
    b_proj2 = b_proj.reshape(1, C).astype(jnp.float32)

    # Pad H to a multiple of 128 (zero weight rows/cols -> zero contribution).
    H_pad = _round_up(H, 128)
    if H_pad != H:
        w_fc_t = jnp.pad(w_fc_t, ((0, 0), (0, H_pad - H)))
        w_proj_t = jnp.pad(w_proj_t, ((0, H_pad - H), (0, 0)))
        b_fc2 = jnp.pad(b_fc2, ((0, 0), (0, H_pad - H)))

    # ---- Per-generation tiling. ------------------------------------------ #
    target_tm, weight_budget, vmem_limit = _chip_tiling(C)
    if tile_m is not None:
        target_tm = tile_m
    # Row tiling: multiples of 16 (bf16 sublane packing), pad M up.
    tm = min(_round_up(target_tm, 16), _round_up(M, 16))
    M_pad = _round_up(M, tm)
    if M_pad != M:
        x2d = jnp.pad(x2d, ((0, M_pad - M), (0, 0)))

    # Hidden-dim tiling: 2 matrices x 2 pipeline buffers x bf16 = 8*th*C bytes
    # of weight tiles must fit the per-chip budget.  When th == H_pad the
    # weight block index is constant -> weights are DMA'd once and reused.
    th_cap = max(128, weight_budget // (8 * C))
    th = _largest_divisor_tile(H_pad, th_cap)

    grid = (M_pad // tm, H_pad // th)

    # Advisory cost for XLA's scheduler around the custom call.
    n_m = grid[0]
    cost = pl.CostEstimate(
        flops=4 * M_pad * C * H_pad,
        transcendentals=M_pad * H_pad,
        bytes_accessed=(n_m * 2 * H_pad * C * 2            # weights re-streamed / m tile
                        + M_pad * C * 2                    # x in (bf16)
                        + M_pad * C * jnp.dtype(out_dtype).itemsize),
    )

    kernel = functools.partial(mlp_kernel, gelu_dtype=gelu_dtype)

    out2d = pl.pallas_call(
        kernel,
        out_shape=jax.ShapeDtypeStruct((M_pad, C), out_dtype),
        grid_spec=pltpu.PrefetchScalarGridSpec(
            num_scalar_prefetch=0,
            grid=grid,
            in_specs=[
                pl.BlockSpec((tm, C), lambda i, h: (i, 0)),    # x rows (resident per m)
                pl.BlockSpec((C, th), lambda i, h: (0, h)),    # c_fc weight tile (C,TH)
                pl.BlockSpec((1, th), lambda i, h: (0, h)),    # c_fc bias slice
                pl.BlockSpec((th, C), lambda i, h: (h, 0)),    # c_proj weight tile (TH,C)
                pl.BlockSpec((1, C), lambda i, h: (0, 0)),     # c_proj bias
            ],
            out_specs=pl.BlockSpec((tm, C), lambda i, h: (i, 0)),
            scratch_shapes=[pltpu.VMEM((tm, C), jnp.float32)],
        ),
        compiler_params=pltpu.CompilerParams(
            dimension_semantics=("parallel", "arbitrary"),
            vmem_limit_bytes=vmem_limit,
        ),
        cost_estimate=cost,
    )(x2d, w_fc_t, b_fc2, w_proj_t, b_proj2)

    return out2d[:M].reshape(B, T, C).astype(out_dtype)


# --------------------------------------------------------------------------- #
# Reference & test
# --------------------------------------------------------------------------- #
def _reference(x, w_fc, b_fc, w_proj, b_proj):
    h = jnp.einsum('btc,hc->bth', x, w_fc) + b_fc
    h = _gelu_tanh(h)
    return jnp.einsum('bth,ch->btc', h, w_proj) + b_proj


if __name__ == "__main__":
    # Small config: batch=2, seq=8, n_embd=32 (hidden = 4*32 = 128).
    B, T, C = 2, 8, 32
    H = 4 * C

    key = jax.random.PRNGKey(0)
    kx, k1, k2, k3, k4 = jax.random.split(key, 5)

    x = jax.random.normal(kx, (B, T, C), dtype=jnp.float32)
    # Deterministic init mimicking nn.Linear shapes (weight: (out, in)).
    w_fc = jax.random.normal(k1, (H, C), dtype=jnp.float32) * 0.02
    b_fc = jax.random.normal(k2, (H,), dtype=jnp.float32) * 0.02
    w_proj = jax.random.normal(k3, (C, H), dtype=jnp.float32) * 0.02
    b_proj = jax.random.normal(k4, (C,), dtype=jnp.float32) * 0.02

    y = mlp_forward(x, w_fc, b_fc, w_proj, b_proj)
    y = jax.block_until_ready(y)

    y_ref = _reference(x, w_fc, b_fc, w_proj, b_proj)
    assert y.shape == (B, T, C)
    # bf16 MXU operands (f32 accumulation) -> loosened tolerance vs f32 ref.
    err = float(jnp.max(jnp.abs(y - y_ref)))
    assert err < 1e-2, f"mismatch vs reference: max abs err = {err}"

    print("KERNEL_OK")
</pallas_src>

<mosaic_0001>
module attributes {stable_mosaic.version = 11 : i64} {
  func.func @mlp_kernel(%arg0: i32, %arg1: i32, %arg2: memref<16x32xbf16, #tpu.memory_space<vmem>>, %arg3: memref<32x128xbf16, #tpu.memory_space<vmem>>, %arg4: memref<1x128xf32, #tpu.memory_space<vmem>>, %arg5: memref<128x32xbf16, #tpu.memory_space<vmem>>, %arg6: memref<1x32xf32, #tpu.memory_space<vmem>>, %arg7: memref<16x32xf32, #tpu.memory_space<vmem>>, %arg8: memref<16x32xf32, #tpu.memory_space<vmem>>) attributes {dimension_semantics = [#tpu.dimension_semantics<parallel>, #tpu.dimension_semantics<arbitrary>], iteration_bounds = array<i64: 1, 1>, scalar_prefetch = 0 : i64, scratch_operands = 1 : i64, tpu.core_type = #tpu.core_type<tc>, window_params = [{transform_indices = @transform_0, window_bounds = array<i64: 16, 32>}, {transform_indices = @transform_1, window_bounds = array<i64: 32, 128>}, {transform_indices = @transform_2, window_bounds = array<i64: 1, 128>}, {transform_indices = @transform_3, window_bounds = array<i64: 128, 32>}, {pipeline_mode = #tpu.pipeline_mode<synchronous>, transform_indices = @transform_4, window_bounds = array<i64: 1, 32>}, {transform_indices = @transform_5, window_bounds = array<i64: 16, 32>}]} {
    %c0_i32 = arith.constant 0 : i32
    %0 = arith.cmpi eq, %arg1, %c0_i32 : i32
    %1 = arith.extui %0 : i1 to i32
    %c0_i32_0 = arith.constant 0 : i32
    %2 = arith.cmpi ne, %1, %c0_i32_0 : i32
    scf.if %2 {
      %c0_19 = arith.constant 0 : index
      %c0_20 = arith.constant 0 : index
      %31 = vector.load %arg6[%c0_19, %c0_20] : memref<1x32xf32, #tpu.memory_space<vmem>>, vector<1x32xf32>
      %32 = vector.shape_cast %31 : vector<1x32xf32> to vector<1x32xf32>
      %33 = vector.broadcast %32 : vector<1x32xf32> to vector<16x32xf32>
      %c0_21 = arith.constant 0 : index
      %c0_22 = arith.constant 0 : index
      %34 = vector.load %arg8[%c0_21, %c0_22] : memref<16x32xf32, #tpu.memory_space<vmem>>, vector<16x32xf32>
      tpu.vector_store %arg8[%c0_21, %c0_22], %33 {strides = array<i32>} : memref<16x32xf32, #tpu.memory_space<vmem>>, vector<16x32xf32>,
    } else {
    }
    %c0 = arith.constant 0 : index
    %c0_1 = arith.constant 0 : index
    %3 = vector.load %arg2[%c0, %c0_1] : memref<16x32xbf16, #tpu.memory_space<vmem>>, vector<16x32xbf16>
    %c0_2 = arith.constant 0 : index
    %c0_3 = arith.constant 0 : index
    %4 = vector.load %arg3[%c0_2, %c0_3] : memref<32x128xbf16, #tpu.memory_space<vmem>>, vector<32x128xbf16>
    %cst = arith.constant dense<0.000000e+00> : vector<16x128xf32>
    %5 = tpu.matmul %3, %4, %cst {dimension_numbers = #tpu.dot_dimension_numbers<[1], [0], [0], [1], [0, 0, 1, 1], [], []>} : vector<16x32xbf16>, vector<32x128xbf16>, vector<16x128xf32> -> vector<16x128xf32>
    %c0_4 = arith.constant 0 : index
    %c0_5 = arith.constant 0 : index
    %6 = vector.load %arg4[%c0_4, %c0_5] : memref<1x128xf32, #tpu.memory_space<vmem>>, vector<1x128xf32>
    %7 = vector.broadcast %6 : vector<1x128xf32> to vector<16x128xf32>
    %8 = arith.addf %5, %7 : vector<16x128xf32>
    %9 = arith.truncf %8 : vector<16x128xf32> to vector<16x128xbf16>
    %cst_6 = arith.constant 5.000000e-01 : bf16
    %10 = vector.broadcast %cst_6 : bf16 to vector<16x128xbf16>
    %11 = arith.mulf %10, %9 : vector<16x128xbf16>
    %cst_7 = arith.constant 4.467770e-02 : bf16
    %12 = vector.broadcast %cst_7 : bf16 to vector<16x128xbf16>
    %13 = arith.mulf %12, %9 : vector<16x128xbf16>
    %14 = arith.mulf %13, %9 : vector<16x128xbf16>
    %15 = arith.mulf %14, %9 : vector<16x128xbf16>
    %16 = arith.addf %9, %15 : vector<16x128xbf16>
    %cst_8 = arith.constant 7.968750e-01 : bf16
    %17 = vector.broadcast %cst_8 : bf16 to vector<16x128xbf16>
    %18 = arith.mulf %17, %16 : vector<16x128xbf16>
    %19 = math.tanh %18 : vector<16x128xbf16>
    %cst_9 = arith.constant 1.000000e+00 : bf16
    %20 = vector.broadcast %cst_9 : bf16 to vector<16x128xbf16>
    %21 = arith.addf %20, %19 : vector<16x128xbf16>
    %22 = arith.mulf %11, %21 : vector<16x128xbf16>
    %c0_10 = arith.constant 0 : index
    %c0_11 = arith.constant 0 : index
    %23 = vector.load %arg8[%c0_10, %c0_11] : memref<16x32xf32, #tpu.memory_space<vmem>>, vector<16x32xf32>
    %c0_12 = arith.constant 0 : index
    %c0_13 = arith.constant 0 : index
    %24 = vector.load %arg5[%c0_12, %c0_13] : memref<128x32xbf16, #tpu.memory_space<vmem>>, vector<128x32xbf16>
    %cst_14 = arith.constant dense<0.000000e+00> : vector<16x32xf32>
    %25 = tpu.matmul %22, %24, %cst_14 {dimension_numbers = #tpu.dot_dimension_numbers<[1], [0], [0], [1], [0, 0, 1, 1], [], []>} : vector<16x128xbf16>, vector<128x32xbf16>, vector<16x32xf32> -> vector<16x32xf32>
    %26 = arith.addf %23, %25 : vector<16x32xf32>
    %c0_15 = arith.constant 0 : index
    %c0_16 = arith.constant 0 : index
    %27 = vector.load %arg8[%c0_15, %c0_16] : memref<16x32xf32, #tpu.memory_space<vmem>>, vector<16x32xf32>
    tpu.vector_store %arg8[%c0_15, %c0_16], %26 {strides = array<i32>} : memref<16x32xf32, #tpu.memory_space<vmem>>, vector<16x32xf32>,
    %c0_i32_17 = arith.constant 0 : i32
    %28 = arith.cmpi eq, %arg1, %c0_i32_17 : i32
    %29 = arith.extui %28 : i1 to i32
    %c0_i32_18 = arith.constant 0 : i32
    %30 = arith.cmpi ne, %29, %c0_i32_18 : i32
    scf.if %30 {
      %c0_19 = arith.constant 0 : index
      %c0_20 = arith.constant 0 : index
      %31 = vector.load %arg8[%c0_19, %c0_20] : memref<16x32xf32, #tpu.memory_space<vmem>>, vector<16x32xf32>
      %c0_21 = arith.constant 0 : index
      %c0_22 = arith.constant 0 : index
      %32 = vector.load %arg7[%c0_21, %c0_22] : memref<16x32xf32, #tpu.memory_space<vmem>>, vector<16x32xf32>
      tpu.vector_store %arg7[%c0_21, %c0_22], %31 {strides = array<i32>} : memref<16x32xf32, #tpu.memory_space<vmem>>, vector<16x32xf32>,
    } else {
    }
    return
  }
  func.func @transform_0(%arg0: i32, %arg1: i32) -> (i32, i32) {
    %c0_i32 = arith.constant 0 : i32
    %c0_i32_0 = arith.constant 0 : i32
    return %arg0, %c0_i32 : i32, i32
  }
  func.func @transform_1(%arg0: i32, %arg1: i32) -> (i32, i32) {
    %c0_i32 = arith.constant 0 : i32
    %c0_i32_0 = arith.constant 0 : i32
    return %c0_i32, %arg1 : i32, i32
  }
  func.func @transform_2(%arg0: i32, %arg1: i32) -> (i32, i32) {
    %c0_i32 = arith.constant 0 : i32
    %c0_i32_0 = arith.constant 0 : i32
    return %c0_i32, %arg1 : i32, i32
  }
  func.func @transform_3(%arg0: i32, %arg1: i32) -> (i32, i32) {
    %c0_i32 = arith.constant 0 : i32
    %c0_i32_0 = arith.constant 0 : i32
    return %arg1, %c0_i32 : i32, i32
  }
  func.func @transform_4(%arg0: i32, %arg1: i32) -> (i32, i32) {
    %c0_i32 = arith.constant 0 : i32
    %c0_i32_0 = arith.constant 0 : i32
    %c0_i32_1 = arith.constant 0 : i32
    return %c0_i32, %c0_i32_0 : i32, i32
  }
  func.func @transform_5(%arg0: i32, %arg1: i32) -> (i32, i32) {
    %c0_i32 = arith.constant 0 : i32
    %c0_i32_0 = arith.constant 0 : i32
    return %arg0, %c0_i32 : i32, i32
  }
}

</mosaic_0001>

<llo_original>
// kernel: tpu_custom_call.1
$region0: #{tpu_custom_call.1}
  #allocation0 [shape = 'u32[]', space=smem, size = 0x4, offset = 0x4, fixed_abs, tag = 'smem constant byte address 0x4 - core index']
  #allocation1 [shape = 'u32[144,128]{1,0:T(1,128)}', space=vmem, size = 0x12000, scoped, tag = 'internal scratch']
  #allocation2 [shape = 'f32[16,32]{1,0:T(8,128)}', space=vmem, size = 0x2000, scoped, tag = 'scratch operand']
  %s0 = inlined_call_operand.hbm [shape: bf16[16,32], index: 0, kind: input, shape index: {}]
  %s1 = inlined_call_operand.hbm [shape: bf16[32,128], index: 1, kind: input, shape index: {}]
  %s2 = inlined_call_operand.hbm [shape: f32[1,128], index: 2, kind: input, shape index: {}]
  %s3 = inlined_call_operand.hbm [shape: bf16[128,32], index: 3, kind: input, shape index: {}]
  %s4 = inlined_call_operand.hbm [shape: f32[1,32], index: 4, kind: input, shape index: {}]
  %s5 = inlined_call_operand.hbm [shape: f32[16,32], index: 5, kind: output, shape index: {}]
  %s6 = sld [smem:[#allocation0]]
  $region58: #{tpu_custom_call.1} parent=0
    _
  %s8 = ssub.s32 1, %s6
  %s9 = scalar_select 0, %s8, %s6
  $region1: #{tpu_custom_call.1} parent=0
    #allocation3 [shape = 'u8[4096]{0}', space=vmem, size = 0x1000, scoped, tag = 'input window, operand 0, single buffered']
    #allocation4 [shape = 's32[1]{0}', space=sflag, size = 0x4, scoped, tag = 'scoped memory for tpu_custom_call.1']
    #allocation5 [shape = 's32[1]{0}', space=sflag, size = 0x4, scoped, tag = 'scoped memory for tpu_custom_call.1']
    #allocation6 [shape = 'u8[8192]{0}', space=vmem, size = 0x2000, scoped, tag = 'input window, operand 1, single buffered']
    #allocation7 [shape = 's32[1]{0}', space=sflag, size = 0x4, scoped, tag = 'scoped memory for tpu_custom_call.1']
    #allocation8 [shape = 'u8[512]{0}', space=vmem, size = 0x400, scoped, tag = 'input window, operand 2, single buffered']
    #allocation9 [shape = 'u8[32768]{0}', space=vmem, size = 0x8000, scoped, tag = 'input window, operand 3, single buffered']
    #allocation10 [shape = 's32[1]{0}', space=sflag, size = 0x4, scoped, tag = 'scoped memory for tpu_custom_call.1']
    #allocation11 [shape = 'u8[512]{0}', space=vmem, size = 0x400, scoped, tag = 'input window, operand 4, single buffered']
    #allocation12 [shape = 'u8[8192]{0}', space=vmem, size = 0x2000, scoped, tag = 'output window, operand 0, single buffered']
    %10 = vsyncpa [#allocation4], 0
    %11 = vsyncpa [#allocation7], 0
    %12 = vsyncpa [#allocation10], 0
    %13 = vsyncpa [#allocation5], 0
    // Predicated region
    $region2: #{tpu_custom_call.1} parent=1 // pred_check
      _
    $region3: #{tpu_custom_call.1} parent=1 // pred_check_branch
      %15 = sbr.rel (0) target = $region5
    $region4: #{tpu_custom_call.1} parent=1 // pred_region
      %s17 = ssub.s32 128, 128
      %18 = vsyncadd [#allocation4], %s17
      %s19 = sshll.u32 [#allocation3], 4
      %s20 = int_to_ptr.vmem [resolvable:$true] %s19
      %25 = dma.hbm_to_vmem [thread:$0]  %s0, 128, %s20, [#allocation4], 64, 64, 4
    $region5: #{tpu_custom_call.1} parent=1 // pred_fallthru
      _
    // Predicated region
    $region6: #{tpu_custom_call.1} parent=1 // pred_check
      _
    $region7: #{tpu_custom_call.1} parent=1 // pred_check_branch
      %27 = sbr.rel (0) target = $region9
    $region8: #{tpu_custom_call.1} parent=1 // pred_region
      %s29 = ssub.s32 256, 256
      %30 = vsyncadd [#allocation7], %s29
      %s31 = sshll.u32 [#allocation6], 4
      %s32 = int_to_ptr.vmem [resolvable:$true] %s31
      %37 = dma.hbm_to_vmem [thread:$0]  %s1, 256, %s32, [#allocation7], 64, 64, 4
    $region9: #{tpu_custom_call.1} parent=1 // pred_fallthru
      _
    // Predicated region
    $region10: #{tpu_custom_call.1} parent=1 // pred_check
      _
    $region11: #{tpu_custom_call.1} parent=1 // pred_check_branch
      %39 = sbr.rel (0) target = $region13
    $region12: #{tpu_custom_call.1} parent=1 // pred_region
      %s41 = ssub.s32 16, 16
      %42 = vsyncadd [#allocation7], %s41
      %s44 = sshll.u32 [#allocation8], 4
      %s45 = int_to_ptr.vmem [resolvable:$true] %s44
      %47 = dma.hbm_to_vmem [thread:$0]  %s2, 16, %s45, [#allocation7]
    $region13: #{tpu_custom_call.1} parent=1 // pred_fallthru
      _
    // Predicated region
    $region14: #{tpu_custom_call.1} parent=1 // pred_check
      _
    $region15: #{tpu_custom_call.1} parent=1 // pred_check_branch
      %49 = sbr.rel (0) target = $region17
    $region16: #{tpu_custom_call.1} parent=1 // pred_region
      %s51 = ssub.s32 1024, 1024
      %52 = vsyncadd [#allocation10], %s51
      %s53 = sshll.u32 [#allocation9], 4
      %s54 = int_to_ptr.vmem [resolvable:$true] %s53
      %59 = dma.hbm_to_vmem [thread:$0]  %s3, 1024, %s54, [#allocation10], 64, 64, 4
    $region17: #{tpu_custom_call.1} parent=1 // pred_fallthru
      _
    // Predicated region
    $region18: #{tpu_custom_call.1} parent=1 // pred_check
      _
    $region19: #{tpu_custom_call.1} parent=1 // pred_check_branch
      %61 = sbr.rel (0) target = $region21
    $region20: #{tpu_custom_call.1} parent=1 // pred_region
      %s63 = ssub.s32 16, 16
      %64 = vsyncadd [#allocation10], %s63
      %s66 = sshll.u32 [#allocation11], 4
      %s67 = int_to_ptr.vmem [resolvable:$true] %s66
      %69 = dma.hbm_to_vmem [thread:$0]  %s4, 16, %s67, [#allocation10]
    $region21: #{tpu_custom_call.1} parent=1 // pred_fallthru
      _
    // Predicated region
    $region22: #{tpu_custom_call.1} parent=1 // pred_check
      _
    $region23: #{tpu_custom_call.1} parent=1 // pred_check_branch
      %71 = sbr.rel (0) target = $region25
    $region24: #{tpu_custom_call.1} parent=1 // pred_region
      %72 = dma.done [#allocation4], 128
    $region25: #{tpu_custom_call.1} parent=1 // pred_fallthru
      _
    // Predicated region
    $region26: #{tpu_custom_call.1} parent=1 // pred_check
      _
    $region27: #{tpu_custom_call.1} parent=1 // pred_check_branch
      %74 = sbr.rel (0) target = $region29
    $region28: #{tpu_custom_call.1} parent=1 // pred_region
      %75 = dma.done [#allocation7], 256
    $region29: #{tpu_custom_call.1} parent=1 // pred_fallthru
      _
    // Predicated region
    $region30: #{tpu_custom_call.1} parent=1 // pred_check
      _
    $region31: #{tpu_custom_call.1} parent=1 // pred_check_branch
      %77 = sbr.rel (0) target = $region33
    $region32: #{tpu_custom_call.1} parent=1 // pred_region
      %78 = dma.done [#allocation7], 16
    $region33: #{tpu_custom_call.1} parent=1 // pred_fallthru
      _
    // Predicated region
    $region34: #{tpu_custom_call.1} parent=1 // pred_check
      _
    $region35: #{tpu_custom_call.1} parent=1 // pred_check_branch
      %80 = sbr.rel (0) target = $region37
    $region36: #{tpu_custom_call.1} parent=1 // pred_region
      %81 = dma.done [#allocation10], 1024
    $region37: #{tpu_custom_call.1} parent=1 // pred_fallthru
      _
    // Predicated region
    $region38: #{tpu_custom_call.1} parent=1 // pred_check
      _
    $region39: #{tpu_custom_call.1} parent=1 // pred_check_branch
      %83 = sbr.rel (0) target = $region41
    $region40: #{tpu_custom_call.1} parent=1 // pred_region
      %84 = dma.done [#allocation10], 16
    $region41: #{tpu_custom_call.1} parent=1 // pred_fallthru
      _
    %p90 = scmp.eq.s32.totalorder 0, 0
    // Predicated region
    $region42: #{tpu_custom_call.1} parent=1 // pred_check
      %p91 = pneg %p90
    $region43: #{tpu_custom_call.1} parent=1 // pred_check_branch
      %93 = sbr.rel (%p91) target = $region45
    $region44: #{tpu_custom_call.1} parent=1 // pred_region
      %v94 = vld [vmem:[#allocation11] sm:$0x1]
      %v96 = vlaneseq
      %v97 = vshrl.u32 %v96, 7
      %v98 = vsub.s32 0, %v97
      %v99 = vrot.slane %v94, %v98
      %vm101 = vcmask 261120
      %102 = vst.msk [vmem:[#allocation2] sm:$0xff] %vm101, %v99
      %103 = vst.msk [vmem:[#allocation2 + $0x8] sm:$0xff] %vm101, %v99
    $region45: #{tpu_custom_call.1} parent=1 // pred_fallthru
      _
    %v104 = vld [vmem:[#allocation3] sm:$0xf]
    %v105 = vld [vmem:[#allocation3 + $0x4] sm:$0xf]
    %v106 = vld [vmem:[#allocation6] sm:$0xf]
    %v107 = vld [vmem:[#allocation6 + $0x4] sm:$0xf]
    %v108 = vld [vmem:[#allocation6 + $0x8] sm:$0xf]
    %v109 = vld [vmem:[#allocation6 + $0xc] sm:$0xf]
    %v110 = vld [vmem:[#allocation8] sm:$0x1]
    %v112 = vlaneseq
    %v113 = vshrl.u32 %v112, 7
    %v114 = vsub.s32 0, %v113
    %v115 = vrot.slane %v110, %v114
    %v119 = vunpack.c.l.b16 %v104
    %v120 = vunpack.c.l.b16 %v105
    %v121 = vpack.c.b16 %v120, %v119
    %v126 = vunpack.c.l.b16 %v106
    %v127 = vunpack.c.l.b16 %v107
    %v128 = vunpack.c.l.b16 %v108
    %v129 = vunpack.c.l.b16 %v109
    %v130 = vpack.c.b16 %v127, %v126
    %v131 = vpack.c.b16 %v129, %v128
    %vm134 = vcmask 261120
    %v136 = vsel %vm134, %v121, 0
    %138 = vmatprep.subr.bf16.mxu0 0
    %139 = vmatpush1.bf16.msra.mxu0 %v130
    %140 = vmatprep.subr.bf16.mxu0 0
    %141 = vmatpush1.bf16.msra.mxu0 %v131
    %142 = vmatprep.subr.bf16.mxu0 0
    %143 = vmatpush1.bf16.msra.mxu0 0
    %144 = vmatprep.subr.bf16.mxu0 0
    %145 = vmatpush1.bf16.msra.mxu0 0
    %146 = vmatprep.subr.bf16.mxu0 0
    %147 = vmatpush1.bf16.msra.mxu0 0
    %148 = vmatprep.subr.bf16.mxu0 0
    %149 = vmatpush1.bf16.msra.mxu0 0
    %150 = vmatprep.subr.bf16.mxu0 0
    %151 = vmatpush1.bf16.msra.mxu0 0
    %152 = vmatprep.subr.bf16.mxu0 0
    %153 = vmatpush1.bf16.msra.mxu0 0
    %154 = vmatprep.subr.bf16.mxu0 0
    %155 = vmatpush1.bf16.msra.mxu0 0
    %156 = vmatprep.subr.bf16.mxu0 0
    %157 = vmatpush1.bf16.msra.mxu0 0
    %158 = vmatprep.subr.bf16.mxu0 0
    %159 = vmatpush1.bf16.msra.mxu0 0
    %160 = vmatprep.subr.bf16.mxu0 0
    %161 = vmatpush1.bf16.msra.mxu0 0
    %162 = vmatprep.subr.bf16.mxu0 0
    %163 = vmatpush1.bf16.msra.mxu0 0
    %164 = vmatprep.subr.bf16.mxu0 0
    %165 = vmatpush1.bf16.msra.mxu0 0
    %166 = vmatprep.subr.bf16.mxu0 0
    %167 = vmatpush1.bf16.msra.mxu0 0
    %168 = vmatprep.subr.bf16.mxu0 0
    %169 = vmatpush1.bf16.msra.mxu0 0
    %170 = vmatprep.mubr.bf16.mxu0 0
    %171 = vmatmul.mubr.bf16.gmra.mrb[0].mxu0 %v136
    %v172 = vpop.f32.mrb[0].mxu0
    %v173 = vadd.f32 %v115, %v172
    %v174 = vpop.f32.mrb[0].mxu0
    %v175 = vpop.f32.mrb[0].mxu0
    %v176 = vadd.f32 %v115, %v175
    %v177 = vpop.f32.mrb[0].mxu0
    %178 = vdwg.mxu0
    %v179 = vpack.c.bf16 %v176, %v173
    %v180 = vmul.bf16 %v179, 1056980736
    %v181 = vmul.bf16 %v179, 1027030327
    %v182 = vmul.bf16 %v181, %v179
    %v183 = vmul.bf16 %v182, %v179
    %v184 = vadd.bf16 %v179, %v183
    %v185 = vmul.bf16 %v184, 1061961548
    %v186 = vtanh.bf16.pop %v185
    %v187 = vadd.bf16 %v186, 1065369472
    %v188 = vmul.bf16 %v180, %v187
    %v189 = vld [vmem:[#allocation2] sm:$0xff]
    %v190 = vld [vmem:[#allocation2 + $0x8] sm:$0xff]
    %v191 = vld [vmem:[#allocation9] sm:$0xf]
    %v192 = vld [vmem:[#allocation9 + $0x4] sm:$0xf]
    %v193 = vld [vmem:[#allocation9 + $0x8] sm:$0xf]
    %v194 = vld [vmem:[#allocation9 + $0xc] sm:$0xf]
    %v195 = vld [vmem:[#allocation9 + $0x10] sm:$0xf]
    %v196 = vld [vmem:[#allocation9 + $0x14] sm:$0xf]
    %v197 = vld [vmem:[#allocation9 + $0x18] sm:$0xf]
    %v198 = vld [vmem:[#allocation9 + $0x1c] sm:$0xf]
    %v199 = vld [vmem:[#allocation9 + $0x20] sm:$0xf]
    %v200 = vld [vmem:[#allocation9 + $0x24] sm:$0xf]
    %v201 = vld [vmem:[#allocation9 + $0x28] sm:$0xf]
    %v202 = vld [vmem:[#allocation9 + $0x2c] sm:$0xf]
    %v203 = vld [vmem:[#allocation9 + $0x30] sm:$0xf]
    %v204 = vld [vmem:[#allocation9 + $0x34] sm:$0xf]
    %v205 = vld [vmem:[#allocation9 + $0x38] sm:$0xf]
    %v206 = vld [vmem:[#allocation9 + $0x3c] sm:$0xf]
    %v223 = vunpack.c.l.b16 %v191
    %v224 = vunpack.c.l.b16 %v192
    %v225 = vunpack.c.l.b16 %v193
    %v226 = vunpack.c.l.b16 %v194
    %v227 = vunpack.c.l.b16 %v195
    %v228 = vunpack.c.l.b16 %v196
    %v229 = vunpack.c.l.b16 %v197
    %v230 = vunpack.c.l.b16 %v198
    %v231 = vunpack.c.l.b16 %v199
    %v232 = vunpack.c.l.b16 %v200
    %v233 = vunpack.c.l.b16 %v201
    %v234 = vunpack.c.l.b16 %v202
    %v235 = vunpack.c.l.b16 %v203
    %v236 = vunpack.c.l.b16 %v204
    %v237 = vunpack.c.l.b16 %v205
    %v238 = vunpack.c.l.b16 %v206
    %v239 = vpack.c.b16 %v224, %v223
    %v240 = vpack.c.b16 %v226, %v225
    %v241 = vpack.c.b16 %v228, %v227
    %v242 = vpack.c.b16 %v230, %v229
    %v243 = vpack.c.b16 %v232, %v231
    %v244 = vpack.c.b16 %v234, %v233
    %v245 = vpack.c.b16 %v236, %v235
    %v246 = vpack.c.b16 %v238, %v237
    %255 = vmatprep.subr.bf16.mxu0 0
    %256 = vmatpush1.bf16.msra.mxu0 %v239
    %257 = vmatprep.subr.bf16.mxu0 0
    %258 = vmatpush1.bf16.msra.mxu0 %v240
    %259 = vmatprep.subr.bf16.mxu0 0
    %260 = vmatpush1.bf16.msra.mxu0 %v241
    %261 = vmatprep.subr.bf16.mxu0 0
    %262 = vmatpush1.bf16.msra.mxu0 %v242
    %263 = vmatprep.subr.bf16.mxu0 0
    %264 = vmatpush1.bf16.msra.mxu0 %v243
    %265 = vmatprep.subr.bf16.mxu0 0
    %266 = vmatpush1.bf16.msra.mxu0 %v244
    %267 = vmatprep.subr.bf16.mxu0 0
    %268 = vmatpush1.bf16.msra.mxu0 %v245
    %269 = vmatprep.subr.bf16.mxu0 0
    %270 = vmatpush1.bf16.msra.mxu0 %v246
    %271 = vmatprep.subr.bf16.mxu0 0
    %272 = vmatpush1.bf16.msra.mxu0 0
    %273 = vmatprep.subr.bf16.mxu0 0
    %274 = vmatpush1.bf16.msra.mxu0 0
    %275 = vmatprep.subr.bf16.mxu0 0
    %276 = vmatpush1.bf16.msra.mxu0 0
    %277 = vmatprep.subr.bf16.mxu0 0
    %278 = vmatpush1.bf16.msra.mxu0 0
    %279 = vmatprep.subr.bf16.mxu0 0
    %280 = vmatpush1.bf16.msra.mxu0 0
    %281 = vmatprep.subr.bf16.mxu0 0
    %282 = vmatpush1.bf16.msra.mxu0 0
    %283 = vmatprep.subr.bf16.mxu0 0
    %284 = vmatpush1.bf16.msra.mxu0 0
    %285 = vmatprep.subr.bf16.mxu0 0
    %286 = vmatpush1.bf16.msra.mxu0 0
    %287 = vmatprep.mubr.bf16.mxu0 0
    %288 = vmatmul.mubr.bf16.gmra.mrb[0].mxu0 %v188
    %v289 = vpop.f32.mrb[0].mxu0
    %v290 = vadd.f32 0.0, %v289
    %v291 = vpop.f32.mrb[0].mxu0
    %v292 = vpop.f32.mrb[0].mxu0
    %v293 = vadd.f32 0.0, %v292
    %v294 = vpop.f32.mrb[0].mxu0
    %295 = vdwg.mxu0
    %v296 = vadd.f32 %v189, %v290
    %v297 = vadd.f32 %v190, %v293
    %298 = vst.msk [vmem:[#allocation2] sm:$0xff] %vm134, %v296
    %299 = vst.msk [vmem:[#allocation2 + $0x8] sm:$0xff] %vm134, %v297
    // Predicated region
    $region46: #{tpu_custom_call.1} parent=1 // pred_check
      %p300 = pneg %p90
    $region47: #{tpu_custom_call.1} parent=1 // pred_check_branch
      %302 = sbr.rel (%p300) target = $region49
    $region48: #{tpu_custom_call.1} parent=1 // pred_region
      %v303 = vld [vmem:[#allocation2] sm:$0xff]
      %v304 = vld [vmem:[#allocation2 + $0x8] sm:$0xff]
      %305 = vst.msk [vmem:[#allocation12] sm:$0xff] %vm134, %v303
      %306 = vst.msk [vmem:[#allocation12 + $0x8] sm:$0xff] %vm134, %v304
    $region49: #{tpu_custom_call.1} parent=1 // pred_fallthru
      _
    // Predicated region
    $region50: #{tpu_custom_call.1} parent=1 // pred_check
      _
    $region51: #{tpu_custom_call.1} parent=1 // pred_check_branch
      %308 = sbr.rel (0) target = $region53
    $region52: #{tpu_custom_call.1} parent=1 // pred_region
      %s310 = ssub.s32 256, 256
      %311 = vsyncadd [#allocation5], %s310
      %s312 = sshll.u32 [#allocation12], 4
      %s313 = int_to_ptr.vmem [resolvable:$true] %s312
      %318 = dma.vmem_to_hbm [thread:$0]  %s313, 256, %s5, [#allocation5], 128, 128, 8
    $region53: #{tpu_custom_call.1} parent=1 // pred_fallthru
      _
    // Predicated region
    $region54: #{tpu_custom_call.1} parent=1 // pred_check
      _
    $region55: #{tpu_custom_call.1} parent=1 // pred_check_branch
      %320 = sbr.rel (0) target = $region57
    $region56: #{tpu_custom_call.1} parent=1 // pred_region
      %321 = dma.done [#allocation5], 256
    $region57: #{tpu_custom_call.1} parent=1 // pred_fallthru
      _
    %322 = vsyncpa [#allocation4], 1
    %323 = vsyncpa [#allocation7], 1
    %324 = vsyncpa [#allocation10], 1
    %325 = vsyncpa [#allocation5], 1

</llo_original>
